<compile_context>
chip_gen: v6e
topology: v6e:2x2x1
jax: 0.10.0
libtpu: 0.0.40
codegen_flags: <defaults>
</compile_context>

<pallas_src>
import numpy as np
import jax
import jax.numpy as jnp
from jax import lax
from jax.experimental import pallas as pl
from jax.experimental.pallas import tpu as pltpu

LANES = 128


def _cdiv(a, b):
    return -(-a // b)


def _round_up(a, b):
    return _cdiv(a, b) * b


def _tree_sum(parts):
    """Pairwise (log-depth) sum of a list of same-shaped values."""
    parts = list(parts)
    while len(parts) > 1:
        nxt = []
        for i in range(0, len(parts) - 1, 2):
            nxt.append(parts[i] + parts[i + 1])
        if len(parts) % 2:
            nxt.append(parts[-1])
        parts = nxt
    return parts[0]


def _default_num_parallel():
    """2-way grid split only on v7x (2 TensorCores/chip); 1 elsewhere."""
    try:
        kind = jax.devices()[0].device_kind.lower()
    except Exception:
        return 1
    return 2 if "v7" in kind else 1


def _default_block_rows(itemsize):
    """Largest row tile keeping 2 inputs x 2 pipeline buffers comfortably
    inside the default scoped-VMEM limit on every TPU generation."""
    try:
        vmem = getattr(pltpu.get_tpu_info(), "vmem_capacity_bytes", 64 << 20)
    except Exception:
        vmem = 64 << 20
    budget = min(vmem // 4, 24 << 20)            # headroom for scratch/internal
    br = budget // (2 * 2 * LANES * itemsize)    # 2 inputs x 2 buffers
    return int(min(max(br, 8), 8192))


def _make_obs_error_kernel(mult, br, bank, rows_total, needs_mask):
    """Kernel specialised on the trace-time multiplicative flag & tiling."""
    n_fold = br // bank

    def kernel(obs_ref, x_ref, out_ref, acc_ref):
        s = pl.program_id(1)

        @pl.when(s == 0)
        def _():
            acc_ref[...] = jnp.zeros_like(acc_ref)

        o = obs_ref[...].astype(jnp.float32)
        x = x_ref[...].astype(jnp.float32)
        d = x - o
        contrib = d * d
        if mult:
            # (x-obs)^2 / obs^2 ; the 1/err^2 factor is applied in the
            # wrapper.  |obs|^2 == obs^2.  Exact reciprocal (EUP path).
            contrib = contrib * pl.reciprocal(o * o, approx=False)

        if needs_mask:
            # Partial / fully-out-of-range tiles DMA unspecified data; zero
            # out every row index >= rows_total so it contributes nothing.
            tile = pl.program_id(0) * pl.num_programs(1) + s
            row_ids = tile * br + lax.broadcasted_iota(
                jnp.int32, (br, LANES), 0)
            contrib = jnp.where(row_ids < rows_total, contrib,
                                jnp.float32(0.0))

        # Fold the (br,128) contribution into the small accumulator bank with
        # a register-resident running sum: 1 acc read-modify-write per step.
        folded = contrib[0:bank, :]
        for k in range(1, n_fold):
            folded = folded + contrib[k * bank:(k + 1) * bank, :]
        acc_ref[...] += folded

        @pl.when(s == pl.num_programs(1) - 1)
        def _():
            # Log-depth reduce of the bank to one lane-dense (8,128) partial.
            out_ref[...] = _tree_sum(
                [acc_ref[k * 8:(k + 1) * 8, :] for k in range(bank // 8)])

    return kernel


def obs_error_forward(obs, x_obs, var, mult_vars, obs_err, *,
                      block_rows=None, num_parallel=None):
    """Pallas implementation of ObsError.forward(obs, x_obs, var)."""
    # Host (numpy) module parameters -> branch resolved at trace time with
    # no device->host sync.
    mult = bool(np.asarray(mult_vars)[var])
    err = float(np.asarray(obs_err)[var])

    obs = jnp.asarray(obs)
    x_obs = jnp.asarray(x_obs)
    # Keep 16-bit float inputs at native width; the kernel upcasts to f32.
    if obs.dtype not in (jnp.float32, jnp.bfloat16, jnp.float16):
        obs = obs.astype(jnp.float32)
    if x_obs.dtype != obs.dtype:
        x_obs = x_obs.astype(obs.dtype)

    def _xla_partial(o, x):
        o32 = o.astype(jnp.float32)
        x32 = x.astype(jnp.float32)
        sq = (x32 - o32) * (x32 - o32)
        if mult:
            sq = sq / (o32 * o32)
        return jnp.sum(sq, dtype=jnp.float32)

    def _finish(total):
        if mult:
            return total / jnp.float32(err * err)
        return total / jnp.float32(err)

    flat_o = obs.reshape(-1)          # free (row-major ravel, no HBM copy)
    flat_x = x_obs.reshape(-1)
    n = int(flat_o.shape[0])

    rows_total = n // LANES
    rem = n - rows_total * LANES
    q = 8 if obs.dtype.itemsize == 4 else 16      # sublane quantum

    # Sub-128-element tail: tiny, summed in plain XLA (no padding copies).
    tail = jnp.float32(0.0)
    if rem:
        tail = _xla_partial(flat_o[rows_total * LANES:],
                            flat_x[rows_total * LANES:])

    if rows_total < q:     # too small for a lane-dense tile: pure XLA
        bulk = (_xla_partial(flat_o[:rows_total * LANES],
                             flat_x[:rows_total * LANES])
                if rows_total else jnp.float32(0.0))
        return _finish(bulk + tail)

    if rem:
        # TODO(synk): a fully copy-free path for n % 128 != 0 needs a manual
        # 1-D DMA pipeline; this prefix slice costs one extra pass over the
        # bulk.  The aligned (n % 128 == 0) case below is zero-copy.
        bulk_o = flat_o[:rows_total * LANES]
        bulk_x = flat_x[:rows_total * LANES]
    else:
        bulk_o, bulk_x = flat_o, flat_x
    bulk_o = bulk_o.reshape(rows_total, LANES)
    bulk_x = bulk_x.reshape(rows_total, LANES)

    if num_parallel is None:
        num_parallel = _default_num_parallel()
    num_parallel = max(1, int(num_parallel))
    if block_rows is None:
        block_rows = _default_block_rows(obs.dtype.itemsize)

    # Tile rows: as large as requested, never larger than the data, multiple
    # of the sublane quantum (and of the 128-row bank when > 128 rows).
    br = min(int(block_rows), _round_up(_cdiv(rows_total, num_parallel), q))
    br = min(br, (rows_total // q) * q)
    br = max(br, q)
    if br > 128:
        br = (br // 128) * 128
    bank = min(br, 128)

    tiles = _cdiv(rows_total, br)
    steps = _cdiv(tiles, num_parallel)
    needs_mask = (num_parallel * steps * br) > rows_total
    last_tile = tiles - 1

    def in_map(p, s):
        # Clamp fully-out-of-range tiles onto the last real tile; the
        # in-kernel row mask discards their contribution.
        return (jnp.minimum(p * steps + s, last_tile), 0)

    kernel = _make_obs_error_kernel(mult, br, bank, rows_total, needs_mask)

    partials = pl.pallas_call(
        kernel,
        out_shape=jax.ShapeDtypeStruct((num_parallel * 8, LANES), jnp.float32),
        grid_spec=pltpu.PrefetchScalarGridSpec(
            num_scalar_prefetch=0,
            grid=(num_parallel, steps),
            in_specs=[pl.BlockSpec((br, LANES), in_map),   # obs tile
                      pl.BlockSpec((br, LANES), in_map)],  # x_obs tile
            out_specs=pl.BlockSpec((8, LANES), lambda p, s: (p, 0)),
            scratch_shapes=[pltpu.VMEM((bank, LANES), jnp.float32)],
        ),
        compiler_params=pltpu.CompilerParams(
            dimension_semantics=("parallel", "arbitrary")),
    )(bulk_o, bulk_x)

    return _finish(jnp.sum(partials, dtype=jnp.float32) + tail)


def build_obs_error_params(vars_, var_types, var_obs_errs, obs_perc_errs,
                           var_stds):
    """Deterministic re-implementation of ObsError.__init__ (host/numpy)."""
    mult_vars = np.zeros(len(vars_), dtype=bool)
    obs_err = np.zeros(len(vars_), dtype='f4')
    for var_type, var_obs_err, obs_perc_err in zip(var_types, var_obs_errs,
                                                   obs_perc_errs):
        var_idxs = [i for i, var in enumerate(vars_) if var_type in var]
        if not obs_perc_err:
            obs_err[var_idxs] = (
                var_obs_err
                / np.array([var_stds[v][0] for v in vars_ if var_type in v])
            ) ** 2.0
        else:
            obs_err[var_idxs] = var_obs_err
        mult_vars[var_idxs] = obs_perc_err
    return mult_vars, obs_err


def _reference_forward(obs, x_obs, var, mult_vars, obs_err):
    o = jnp.asarray(obs, jnp.float32)
    x = jnp.asarray(x_obs, jnp.float32)
    err = jnp.float32(np.asarray(obs_err)[var])
    if bool(np.asarray(mult_vars)[var]):
        return jnp.sum((x - o) ** 2.0 / (err * jnp.abs(o)) ** 2.0)
    return jnp.sum((x - o) ** 2.0) / err


if __name__ == "__main__":
    vars_ = ["temperature_850", "geopotential_500", "u_wind_850", "v_wind_850"]
    var_types = ["temperature", "geopotential", "wind"]
    var_obs_errs = [1.0, 10.0, 0.05]
    obs_perc_errs = [False, False, True]     # wind -> multiplicative error
    var_stds = {
        "temperature_850": [7.5],
        "geopotential_500": [3350.0],
        "u_wind_850": [8.2],
        "v_wind_850": [6.3],
    }
    mult_vars, obs_err = build_obs_error_params(
        vars_, var_types, var_obs_errs, obs_perc_errs, var_stds)

    key = jax.random.PRNGKey(0)
    ks = jax.random.split(key, 8)

    def mk(k0, k1, shape):
        o = jax.random.normal(k0, shape, dtype=jnp.float32) + 2.0
        x = o + 0.1 * jax.random.normal(k1, shape, dtype=jnp.float32)
        return o, x

    obs_a, x_a = mk(ks[0], ks[1], (2, 4, 16, 16))    # 2048 elems, aligned
    obs_b, x_b = mk(ks[2], ks[3], (3, 5, 7, 11))     # 1155 elems, ragged
    obs_c, x_c = mk(ks[4], ks[5], (2, 4, 32, 32))    # 8192 elems
    obs_d, x_d = mk(ks[6], ks[7], (4, 8, 64, 128))   # 262144 elems, bank fold

    cases = [
        ((obs_a, x_a), 0, {}),                        # additive, auto config
        ((obs_a, x_a), 2, {}),                        # multiplicative
        ((obs_a, x_a), 0, {"num_parallel": 2}),       # forced 2-way split
        ((obs_b, x_b), 0, {}),                        # ragged tail, additive
        ((obs_b, x_b), 2, {"num_parallel": 2}),       # ragged + mask, mult
        ((obs_c, x_c), 2, {"block_rows": 8}),         # multi-step accumulation
        ((obs_c, x_c), 0, {"block_rows": 8, "num_parallel": 2}),
        ((obs_d, x_d), 2, {}),                        # large tile + bank fold
        ((obs_a.astype(jnp.bfloat16), x_a.astype(jnp.bfloat16)), 0, {}),  # bf16
    ]

    for (o, x), var, kw in cases:
        got = jax.block_until_ready(
            obs_error_forward(o, x, var, mult_vars, obs_err, **kw))
        want = _reference_forward(o, x, var, mult_vars, obs_err)
        np.testing.assert_allclose(np.asarray(got), np.asarray(want),
                                   rtol=2e-4, atol=1e-5)

    print("KERNEL_OK")
</pallas_src>

<mosaic_0001>
module attributes {stable_mosaic.version = 11 : i64} {
  func.func @kernel(%arg0: i32, %arg1: i32, %arg2: memref<16x128xf32, #tpu.memory_space<vmem>>, %arg3: memref<16x128xf32, #tpu.memory_space<vmem>>, %arg4: memref<8x128xf32, #tpu.memory_space<vmem>>, %arg5: memref<16x128xf32, #tpu.memory_space<vmem>>) attributes {dimension_semantics = [#tpu.dimension_semantics<parallel>, #tpu.dimension_semantics<arbitrary>], iteration_bounds = array<i64: 1, 1>, scalar_prefetch = 0 : i64, scratch_operands = 1 : i64, tpu.core_type = #tpu.core_type<tc>, window_params = [{transform_indices = @transform_0, window_bounds = array<i64: 16, 128>}, {transform_indices = @transform_1, window_bounds = array<i64: 16, 128>}, {transform_indices = @transform_2, window_bounds = array<i64: 8, 128>}]} {
    %c0_i32 = arith.constant 0 : i32
    %0 = arith.cmpi eq, %arg1, %c0_i32 : i32
    %1 = arith.extui %0 : i1 to i32
    %c0_i32_0 = arith.constant 0 : i32
    %2 = arith.cmpi ne, %1, %c0_i32_0 : i32
    scf.if %2 {
      %cst = arith.constant 0.000000e+00 : f32
      %13 = vector.broadcast %cst : f32 to vector<16x128xf32>
      %c0_10 = arith.constant 0 : index
      %c0_11 = arith.constant 0 : index
      %14 = vector.load %arg5[%c0_10, %c0_11] : memref<16x128xf32, #tpu.memory_space<vmem>>, vector<16x128xf32>
      tpu.vector_store %arg5[%c0_10, %c0_11], %13 {strides = array<i32>} : memref<16x128xf32, #tpu.memory_space<vmem>>, vector<16x128xf32>,
    } else {
    }
    %c0 = arith.constant 0 : index
    %c0_1 = arith.constant 0 : index
    %3 = vector.load %arg2[%c0, %c0_1] : memref<16x128xf32, #tpu.memory_space<vmem>>, vector<16x128xf32>
    %c0_2 = arith.constant 0 : index
    %c0_3 = arith.constant 0 : index
    %4 = vector.load %arg3[%c0_2, %c0_3] : memref<16x128xf32, #tpu.memory_space<vmem>>, vector<16x128xf32>
    %5 = arith.subf %4, %3 : vector<16x128xf32>
    %6 = arith.mulf %5, %5 : vector<16x128xf32>
    %c0_4 = arith.constant 0 : index
    %c0_5 = arith.constant 0 : index
    %7 = vector.load %arg5[%c0_4, %c0_5] : memref<16x128xf32, #tpu.memory_space<vmem>>, vector<16x128xf32>
    %8 = arith.addf %7, %6 : vector<16x128xf32>
    %c0_6 = arith.constant 0 : index
    %c0_7 = arith.constant 0 : index
    %9 = vector.load %arg5[%c0_6, %c0_7] : memref<16x128xf32, #tpu.memory_space<vmem>>, vector<16x128xf32>
    tpu.vector_store %arg5[%c0_6, %c0_7], %8 {strides = array<i32>} : memref<16x128xf32, #tpu.memory_space<vmem>>, vector<16x128xf32>,
    %c0_i32_8 = arith.constant 0 : i32
    %10 = arith.cmpi eq, %arg1, %c0_i32_8 : i32
    %11 = arith.extui %10 : i1 to i32
    %c0_i32_9 = arith.constant 0 : i32
    %12 = arith.cmpi ne, %11, %c0_i32_9 : i32
    scf.if %12 {
      %c0_10 = arith.constant 0 : index
      %c0_11 = arith.constant 0 : index
      %13 = vector.load %arg5[%c0_10, %c0_11] : memref<16x128xf32, #tpu.memory_space<vmem>>, vector<8x128xf32>
      %c8 = arith.constant 8 : index
      %c0_12 = arith.constant 0 : index
      %14 = vector.load %arg5[%c8, %c0_12] : memref<16x128xf32, #tpu.memory_space<vmem>>, vector<8x128xf32>
      %15 = arith.addf %13, %14 : vector<8x128xf32>
      %c0_13 = arith.constant 0 : index
      %c0_14 = arith.constant 0 : index
      %16 = vector.load %arg4[%c0_13, %c0_14] : memref<8x128xf32, #tpu.memory_space<vmem>>, vector<8x128xf32>
      tpu.vector_store %arg4[%c0_13, %c0_14], %15 {strides = array<i32>} : memref<8x128xf32, #tpu.memory_space<vmem>>, vector<8x128xf32>,
    } else {
    }
    return
  }
  func.func @transform_0(%arg0: i32, %arg1: i32) -> (i32, i32) {
    %c1_i32 = arith.constant 1 : i32
    %0 = arith.muli %arg0, %c1_i32 : i32
    %1 = arith.addi %0, %arg1 : i32
    %c0_i32 = arith.constant 0 : i32
    %2 = arith.minsi %1, %c0_i32 : i32
    %c0_i32_0 = arith.constant 0 : i32
    %c0_i32_1 = arith.constant 0 : i32
    return %2, %c0_i32_0 : i32, i32
  }
  func.func @transform_1(%arg0: i32, %arg1: i32) -> (i32, i32) {
    %c1_i32 = arith.constant 1 : i32
    %0 = arith.muli %arg0, %c1_i32 : i32
    %1 = arith.addi %0, %arg1 : i32
    %c0_i32 = arith.constant 0 : i32
    %2 = arith.minsi %1, %c0_i32 : i32
    %c0_i32_0 = arith.constant 0 : i32
    %c0_i32_1 = arith.constant 0 : i32
    return %2, %c0_i32_0 : i32, i32
  }
  func.func @transform_2(%arg0: i32, %arg1: i32) -> (i32, i32) {
    %c0_i32 = arith.constant 0 : i32
    %c0_i32_0 = arith.constant 0 : i32
    return %arg0, %c0_i32 : i32, i32
  }
}

</mosaic_0001>

<llo_original>
// kernel: tpu_custom_call.1
$region0: #{tpu_custom_call.1}
  #allocation0 [shape = 'u32[]', space=smem, size = 0x4, offset = 0x4, fixed_abs, tag = 'smem constant byte address 0x4 - core index']
  #allocation1 [shape = 'u32[144,128]{1,0:T(1,128)}', space=vmem, size = 0x12000, scoped, tag = 'internal scratch']
  #allocation2 [shape = 'f32[16,128]{1,0:T(8,128)}', space=vmem, size = 0x2000, scoped, tag = 'scratch operand']
  %s0 = inlined_call_operand.hbm [shape: f32[16,128], index: 0, kind: input, shape index: {}]
  %s1 = inlined_call_operand.hbm [shape: f32[16,128], index: 1, kind: input, shape index: {}]
  %s2 = inlined_call_operand.hbm [shape: f32[8,128], index: 2, kind: output, shape index: {}]
  %s3 = sld [smem:[#allocation0]]
  $region34: #{tpu_custom_call.1} parent=0
    _
  %s5 = ssub.s32 1, %s3
  %s6 = scalar_select 0, %s5, %s3
  $region1: #{tpu_custom_call.1} parent=0
    #allocation3 [shape = 'u8[8192]{0}', space=vmem, size = 0x2000, scoped, tag = 'input window, operand 0, single buffered']
    #allocation4 [shape = 's32[1]{0}', space=sflag, size = 0x4, scoped, tag = 'scoped memory for tpu_custom_call.1']
    #allocation5 [shape = 's32[1]{0}', space=sflag, size = 0x4, scoped, tag = 'scoped memory for tpu_custom_call.1']
    #allocation6 [shape = 'u8[8192]{0}', space=vmem, size = 0x2000, scoped, tag = 'input window, operand 1, single buffered']
    #allocation7 [shape = 's32[1]{0}', space=sflag, size = 0x4, scoped, tag = 'scoped memory for tpu_custom_call.1']
    #allocation8 [shape = 'u8[4096]{0}', space=vmem, size = 0x1000, scoped, tag = 'output window, operand 0, single buffered']
    %7 = vsyncpa [#allocation4], 0
    %8 = vsyncpa [#allocation7], 0
    %9 = vsyncpa [#allocation5], 0
    // Predicated region
    $region2: #{tpu_custom_call.1} parent=1 // pred_check
      _
    $region3: #{tpu_custom_call.1} parent=1 // pred_check_branch
      %11 = sbr.rel (0) target = $region5
    $region4: #{tpu_custom_call.1} parent=1 // pred_region
      %s12 = sadd.s32 0, 0
      %p13 = scmp.lt.s32.totalorder %s12, 0
      %s14 = scalar_select %p13, %s12, 0
      %s15 = smul.u32 2, %s14
      %s17 = ssub.s32 256, 256
      %18 = vsyncadd [#allocation4], %s17
      %s19 = smul.addr %s15, 128
      %s20 = scalar_lea.hbm %s0, %s19
      %s21 = sshll.u32 [#allocation3], 4
      %s22 = int_to_ptr.vmem [resolvable:$true] %s21
      %27 = dma.hbm_to_vmem [thread:$0]  %s20, 256, %s22, [#allocation4], 128, 128, 8
    $region5: #{tpu_custom_call.1} parent=1 // pred_fallthru
      _
    // Predicated region
    $region6: #{tpu_custom_call.1} parent=1 // pred_check
      _
    $region7: #{tpu_custom_call.1} parent=1 // pred_check_branch
      %29 = sbr.rel (0) target = $region9
    $region8: #{tpu_custom_call.1} parent=1 // pred_region
      %s30 = sadd.s32 0, 0
      %p31 = scmp.lt.s32.totalorder %s30, 0
      %s32 = scalar_select %p31, %s30, 0
      %s33 = smul.u32 2, %s32
      %s35 = ssub.s32 256, 256
      %36 = vsyncadd [#allocation7], %s35
      %s37 = smul.addr %s33, 128
      %s38 = scalar_lea.hbm %s1, %s37
      %s39 = sshll.u32 [#allocation6], 4
      %s40 = int_to_ptr.vmem [resolvable:$true] %s39
      %45 = dma.hbm_to_vmem [thread:$0]  %s38, 256, %s40, [#allocation7], 128, 128, 8
    $region9: #{tpu_custom_call.1} parent=1 // pred_fallthru
      _
    // Predicated region
    $region10: #{tpu_custom_call.1} parent=1 // pred_check
      _
    $region11: #{tpu_custom_call.1} parent=1 // pred_check_branch
      %47 = sbr.rel (0) target = $region13
    $region12: #{tpu_custom_call.1} parent=1 // pred_region
      %48 = dma.done [#allocation4], 256
    $region13: #{tpu_custom_call.1} parent=1 // pred_fallthru
      _
    // Predicated region
    $region14: #{tpu_custom_call.1} parent=1 // pred_check
      _
    $region15: #{tpu_custom_call.1} parent=1 // pred_check_branch
      %50 = sbr.rel (0) target = $region17
    $region16: #{tpu_custom_call.1} parent=1 // pred_region
      %51 = dma.done [#allocation7], 256
    $region17: #{tpu_custom_call.1} parent=1 // pred_fallthru
      _
    %s52 = sadd.s32 0, 0
    %p53 = scmp.lt.s32.totalorder %s52, 0
    %s54 = scalar_select %p53, %s52, 0
    %s55 = smul.u32 2, %s54
    %s56 = sadd.s32 0, 0
    %p57 = scmp.lt.s32.totalorder %s56, 0
    %s58 = scalar_select %p57, %s56, 0
    %s59 = smul.u32 2, %s58
    %p60 = scmp.eq.s32.totalorder 0, 0
    // Predicated region
    $region18: #{tpu_custom_call.1} parent=1 // pred_check
      %p61 = pneg %p60
    $region19: #{tpu_custom_call.1} parent=1 // pred_check_branch
      %63 = sbr.rel (%p61) target = $region21
    $region20: #{tpu_custom_call.1} parent=1 // pred_region
      %64 = vst [vmem:[#allocation2] sm:$0xff] 0.0
      %65 = vst [vmem:[#allocation2 + $0x8] sm:$0xff] 0.0
    $region21: #{tpu_custom_call.1} parent=1 // pred_fallthru
      _
    %v66 = vld [vmem:[#allocation3] sm:$0xff]
    %v67 = vld [vmem:[#allocation3 + $0x8] sm:$0xff]
    %v68 = vld [vmem:[#allocation6] sm:$0xff]
    %v69 = vld [vmem:[#allocation6 + $0x8] sm:$0xff]
    %v70 = vsub.f32 %v68, %v66
    %v71 = vsub.f32 %v69, %v67
    %v72 = vmul.f32 %v70, %v70
    %v73 = vmul.f32 %v71, %v71
    %v74 = vld [vmem:[#allocation2] sm:$0xff]
    %v75 = vld [vmem:[#allocation2 + $0x8] sm:$0xff]
    %v76 = vadd.f32 %v74, %v72
    %v77 = vadd.f32 %v75, %v73
    %78 = vst [vmem:[#allocation2] sm:$0xff] %v76
    %79 = vst [vmem:[#allocation2 + $0x8] sm:$0xff] %v77
    // Predicated region
    $region22: #{tpu_custom_call.1} parent=1 // pred_check
      %p80 = pneg %p60
    $region23: #{tpu_custom_call.1} parent=1 // pred_check_branch
      %82 = sbr.rel (%p80) target = $region25
    $region24: #{tpu_custom_call.1} parent=1 // pred_region
      %v83 = vld [vmem:[#allocation2] sm:$0xff]
      %v84 = vld [vmem:[#allocation2 + $0x8] sm:$0xff]
      %v85 = vadd.f32 %v83, %v84
      %86 = vst [vmem:[#allocation8] sm:$0xff] %v85
    $region25: #{tpu_custom_call.1} parent=1 // pred_fallthru
      _
    // Predicated region
    $region26: #{tpu_custom_call.1} parent=1 // pred_check
      _
    $region27: #{tpu_custom_call.1} parent=1 // pred_check_branch
      %88 = sbr.rel (0) target = $region29
    $region28: #{tpu_custom_call.1} parent=1 // pred_region
      %s90 = ssub.s32 128, 128
      %91 = vsyncadd [#allocation5], %s90
      %s93 = sshll.u32 [#allocation8], 4
      %s94 = int_to_ptr.vmem [resolvable:$true] %s93
      %96 = dma.vmem_to_hbm [thread:$0]  %s94, 128, %s2, [#allocation5]
    $region29: #{tpu_custom_call.1} parent=1 // pred_fallthru
      _
    // Predicated region
    $region30: #{tpu_custom_call.1} parent=1 // pred_check
      _
    $region31: #{tpu_custom_call.1} parent=1 // pred_check_branch
      %98 = sbr.rel (0) target = $region33
    $region32: #{tpu_custom_call.1} parent=1 // pred_region
      %99 = dma.done [#allocation5], 128
    $region33: #{tpu_custom_call.1} parent=1 // pred_fallthru
      _
    %100 = vsyncpa [#allocation4], 1
    %101 = vsyncpa [#allocation7], 1
    %102 = vsyncpa [#allocation5], 1

</llo_original>
